<compile_context>
chip_gen: v7x
topology: tpu7x:2x2x1
jax: 0.10.0
libtpu: 0.0.40
codegen_flags: <defaults>
</compile_context>

<pallas_src>
import jax
import jax.numpy as jnp
from jax import lax
from jax.experimental import pallas as pl
from jax.experimental.pallas import tpu as pltpu

# ----------------------------- config (synthetic) -----------------------------
CONFIG = dict(
    d_condition=8,
    d_model=32,
    condition_dim=32,      # == d_model (asserted in __init__ when post_d_model is None)
    num_permutation=4,
)
SEQUENCE_LENGTH = 8
BATCH = 2


# --------------------------------- kernel -------------------------------------
def _mse_partial_kernel(cond_ref, perm_ref, rhs_ref, x0_ref, psum_ref, pcnt_ref):
    # cond_ref: (tb, d_cond)            f32  VMEM   (row tile of the condition)
    # perm_ref: (tb, 1)                 i32  VMEM   (permutation-state indices)
    # rhs_ref:  (d_cond + P + 1, d_model) f32 VMEM  ([W^T ; emb ; bias], resident)
    # x0_ref:   (tb, tn)                f32/bf16 VMEM (lane-dense x_0 tile, may hold NaN)
    # psum_ref: (1, 1)                  f32  SMEM   per-tile sum of squared valid errors
    # pcnt_ref: (1, 1)                  f32  SMEM   per-tile count of valid (non-NaN) elems
    tb, d_cond = cond_ref.shape
    d_model = rhs_ref.shape[1]
    P = rhs_ref.shape[0] - d_cond - 1
    tn = x0_ref.shape[1]

    # --- fused condition: [cond | onehot(perm) | 1] @ [W^T ; emb ; bias] -------
    onehot = (lax.broadcasted_iota(jnp.int32, (tb, P), 1) == perm_ref[...]).astype(jnp.float32)
    ones = jnp.ones((tb, 1), jnp.float32)
    lhs = jnp.concatenate([cond_ref[...].astype(jnp.float32), onehot, ones], axis=1)
    c_small = jnp.dot(lhs, rhs_ref[...], preferred_element_type=jnp.float32)   # (tb, d_model)

    # Lane-replicate over the sequence slots covered by this lane tile
    # (tn is a multiple of d_model, and tile offsets are multiples of d_model,
    #  so the repeated pattern is tile-offset independent).
    c = jnp.tile(c_small, (1, tn // d_model))                                   # (tb, tn)

    # --- nanmean MSE partials ---------------------------------------------------
    x0 = x0_ref[...].astype(jnp.float32)              # upcast after DMA (bf16 input OK)
    mask = jnp.isnan(x0)                               # positions excluded by nanmean
    diff = jnp.where(mask, jnp.float32(0.0), c - x0)   # single fused mask select
    psum_ref[0, 0] = jnp.sum(diff * diff)              # f32 accumulation
    # valid count folded into the same pass as an f32 0/1 sum (exact up to 2^24/tile).
    # TODO(synk): for >2^24 valid elements per tile / huge tile counts, promote the
    # cross-tile count reduction to a wider accumulator.
    pcnt_ref[0, 0] = jnp.sum(jnp.where(mask, jnp.float32(0.0), jnp.float32(1.0)))


# ------------------------------ parameter prep ---------------------------------
def prepare_params(w, b, emb_weight):
    """One-time parameter prep; hoisted out of the per-call path (cache the result)."""
    d_model, d_cond = w.shape
    rhs = jnp.concatenate(
        [
            jnp.transpose(w).astype(jnp.float32),            # (d_cond, d_model)  W^T
            emb_weight.astype(jnp.float32),                  # (P, d_model)       embedding table
            b.reshape(1, d_model).astype(jnp.float32),       # (1, d_model)       bias
        ],
        axis=0,
    )                                                        # (d_cond + P + 1, d_model)
    return rhs


# --------------------------------- wrapper -------------------------------------
def model_mse_loss(condition, x_0, perm_idx, rhs, *, tile_b=None, tile_n=None):
    """Replicates ModelMSELoss.forward(x_0=..., condition=..., permutation_state=...).

    rhs is the pre-stacked [W^T ; emb ; bias] from prepare_params() (built once).
    """
    B, d_cond = condition.shape
    _, S, d_model = x_0.shape
    assert x_0.shape[-1] == rhs.shape[1], "d_model should be equal to dim_per_token"
    N = S * d_model
    K = rhs.shape[0]                                   # d_cond + P + 1

    # Lane-dense x_0 slab in its native dtype (bf16 stays bf16 -> half the HBM bytes).
    x0_flat = x_0.reshape(B, N)
    perm2d = perm_idx.reshape(B, 1)                    # (B, 1) int32

    # ---- tile selection -------------------------------------------------------
    # Defaults cover the whole (tiny) problem in one step.  For large shapes pick
    # lane-dense tiles >= (8, 512) f32 / (16, 1024)+ bf16, keep 2x double-buffered
    # x0 tiles + resident params under the scoped-VMEM ceiling (16 MiB v5e,
    # 32 MiB default on v6e/v7x; raise vmem_limit_bytes if needed, staying well
    # under v7x's 64 MiB physical VMEM).
    tile_b = B if tile_b is None else tile_b
    tile_n = N if tile_n is None else tile_n
    assert B % tile_b == 0 and N % tile_n == 0
    assert tile_n % d_model == 0, "lane tile must cover whole d_model slots"
    assert tile_n == N or tile_n % 128 == 0
    assert tile_b == B or tile_b % 8 == 0
    grid = (B // tile_b, N // tile_n)

    itemsize = jnp.dtype(x_0.dtype).itemsize
    cost = pl.CostEstimate(
        flops=2 * grid[0] * grid[1] * tile_b * K * d_model + 5 * B * N,
        transcendentals=0,
        bytes_accessed=B * N * itemsize + (rhs.size + condition.size) * 4
        + perm2d.size * 4 + grid[0] * grid[1] * 8,
    )

    psum, pcnt = pl.pallas_call(
        _mse_partial_kernel,
        out_shape=(
            jax.ShapeDtypeStruct(grid, jnp.float32),   # per-tile sum of squared errors
            jax.ShapeDtypeStruct(grid, jnp.float32),   # per-tile valid-element count
        ),
        grid=grid,
        in_specs=[
            pl.BlockSpec((tile_b, d_cond), lambda i, j: (i, 0)),   # condition (row-resident)
            pl.BlockSpec((tile_b, 1), lambda i, j: (i, 0)),        # permutation indices
            pl.BlockSpec((K, d_model), lambda i, j: (0, 0)),       # [W^T; emb; bias] (resident)
            pl.BlockSpec((tile_b, tile_n), lambda i, j: (i, j)),   # x_0 (streamed)
        ],
        out_specs=(
            pl.BlockSpec((1, 1), lambda i, j: (i, j), memory_space=pltpu.SMEM),
            pl.BlockSpec((1, 1), lambda i, j: (i, j), memory_space=pltpu.SMEM),
        ),
        compiler_params=pltpu.CompilerParams(
            # No carried accumulator -> both axes independent; lets v7x megacore
            # shard the mem-bound stream across both TensorCores.
            dimension_semantics=("parallel", "parallel"),
        ),
        cost_estimate=cost,
    )(condition, perm2d, rhs, x0_flat)

    # Tiny final reduction + divide in XLA.
    # NOTE: all-NaN input yields 0/0 = NaN, matching torch.nanmean (intentional).
    return jnp.sum(psum) / jnp.sum(pcnt)


# ----------------------------------- main --------------------------------------
if __name__ == "__main__":
    key = jax.random.PRNGKey(0)
    k_cond, k_x0, k_w, k_b = jax.random.split(key, 4)

    d_cond = CONFIG["d_condition"]
    d_model = CONFIG["d_model"]
    P = CONFIG["num_permutation"]
    B, S = BATCH, SEQUENCE_LENGTH

    # Deterministic parameter init (synthetic, not a checkpoint load).
    w = jax.random.normal(k_w, (d_model, d_cond), jnp.float32) * 0.02
    b = jax.random.normal(k_b, (d_model,), jnp.float32) * 0.02
    emb_weight = jnp.full((P, d_model), 1.0 / d_model, jnp.float32)  # ones / d_model, as in __init__

    # Inputs.
    condition = jax.random.normal(k_cond, (B, d_cond), jnp.float32)
    x_0 = jax.random.normal(k_x0, (B, S, d_model), jnp.float32)
    # Sprinkle some NaNs so the nanmean path is exercised.
    x_0 = x_0.at[0, 0, :5].set(jnp.nan)
    x_0 = x_0.at[1, 3, 10:20].set(jnp.nan)
    perm_idx = jnp.array([0, 1], dtype=jnp.int32)

    # One-time parameter prep (outside the per-call path).
    rhs = prepare_params(w, b, emb_weight)
    rhs = jax.block_until_ready(rhs)

    def ref_loss(x0_arr):
        c_full = condition @ w.T + b + emb_weight[perm_idx]
        x0f = x0_arr.astype(jnp.float32)
        mask = jnp.isnan(x0f)
        sq = jnp.where(mask, 0.0, (c_full[:, None, :] - jnp.nan_to_num(x0f, nan=0.0)) ** 2)
        return jnp.sum(sq) / jnp.sum(~mask)

    # Single-tile path (whole problem in one grid step).
    loss = model_mse_loss(condition, x_0, perm_idx, rhs)
    loss = jax.block_until_ready(loss)
    ref = ref_loss(x_0)
    assert jnp.allclose(loss, ref, rtol=1e-5, atol=1e-5), (loss, ref)

    # Gridded path (two lane tiles) exercising the partial-sum reduction.
    loss_g = model_mse_loss(condition, x_0, perm_idx, rhs, tile_n=128)
    loss_g = jax.block_until_ready(loss_g)
    assert jnp.allclose(loss_g, ref, rtol=1e-5, atol=1e-5), (loss_g, ref)

    # bfloat16 x_0 path (halves HBM traffic for the dominant operand; upcast in-kernel).
    x_0_bf16 = x_0.astype(jnp.bfloat16)
    loss_bf = model_mse_loss(condition, x_0_bf16, perm_idx, rhs)
    loss_bf = jax.block_until_ready(loss_bf)
    ref_bf = ref_loss(x_0_bf16)
    assert jnp.allclose(loss_bf, ref_bf, rtol=1e-4, atol=1e-5), (loss_bf, ref_bf)

    print("KERNEL_OK")
</pallas_src>

<mosaic_0001>
module attributes {stable_mosaic.version = 11 : i64} {
  func.func @_mse_partial_kernel(%arg0: i32, %arg1: i32, %arg2: memref<2x8xf32, #tpu.memory_space<vmem>>, %arg3: memref<2x1xi32, #tpu.memory_space<vmem>>, %arg4: memref<13x32xf32, #tpu.memory_space<vmem>>, %arg5: memref<2x256xf32, #tpu.memory_space<vmem>>, %arg6: memref<1x1xf32, #tpu.memory_space<smem>>, %arg7: memref<1x1xf32, #tpu.memory_space<smem>>) attributes {dimension_semantics = [#tpu.dimension_semantics<parallel>, #tpu.dimension_semantics<parallel>], iteration_bounds = array<i64: 1, 1>, scalar_prefetch = 0 : i64, scratch_operands = 0 : i64, tpu.core_type = #tpu.core_type<tc>, window_params = [{transform_indices = @transform_0, window_bounds = array<i64: 2, 8>}, {transform_indices = @transform_1, window_bounds = array<i64: 2, 1>}, {pipeline_mode = #tpu.pipeline_mode<synchronous>, transform_indices = @transform_2, window_bounds = array<i64: 13, 32>}, {transform_indices = @transform_3, window_bounds = array<i64: 2, 256>}, {transform_indices = @transform_4, window_bounds = array<i64: 1, 1>}, {transform_indices = @transform_5, window_bounds = array<i64: 1, 1>}]} {
    %0 = tpu.iota {dimensions = array<i32: 1>} : vector<2x4xi32>
    %c0 = arith.constant 0 : index
    %c0_0 = arith.constant 0 : index
    %1 = vector.load %arg3[%c0, %c0_0] : memref<2x1xi32, #tpu.memory_space<vmem>>, vector<2x1xi32>
    %2 = vector.broadcast %1 : vector<2x1xi32> to vector<2x4xi32>
    %3 = arith.cmpi eq, %0, %2 : vector<2x4xi32>
    %4 = arith.extui %3 : vector<2x4xi1> to vector<2x4xi32>
    %5 = arith.sitofp %4 : vector<2x4xi32> to vector<2x4xf32>
    %cst = arith.constant 1.000000e+00 : f32
    %6 = vector.broadcast %cst : f32 to vector<2x1xf32>
    %c0_1 = arith.constant 0 : index
    %c0_2 = arith.constant 0 : index
    %7 = vector.load %arg2[%c0_1, %c0_2] : memref<2x8xf32, #tpu.memory_space<vmem>>, vector<2x8xf32>
    %8 = tpu.concatenate %7, %5, %6 in 1 : vector<2x8xf32>, vector<2x4xf32>, vector<2x1xf32> -> vector<2x13xf32>
    %c0_3 = arith.constant 0 : index
    %c0_4 = arith.constant 0 : index
    %9 = vector.load %arg4[%c0_3, %c0_4] : memref<13x32xf32, #tpu.memory_space<vmem>>, vector<13x32xf32>
    %cst_5 = arith.constant dense<0.000000e+00> : vector<2x32xf32>
    %10 = tpu.matmul %8, %9, %cst_5 {dimension_numbers = #tpu.dot_dimension_numbers<[1], [0], [0], [1], [0, 0, 1, 1], [], []>} : vector<2x13xf32>, vector<13x32xf32>, vector<2x32xf32> -> vector<2x32xf32>
    %11 = tpu.concatenate %10, %10, %10, %10, %10, %10, %10, %10 in 1 : vector<2x32xf32>, vector<2x32xf32>, vector<2x32xf32>, vector<2x32xf32>, vector<2x32xf32>, vector<2x32xf32>, vector<2x32xf32>, vector<2x32xf32> -> vector<2x256xf32>
    %c0_6 = arith.constant 0 : index
    %c0_7 = arith.constant 0 : index
    %12 = vector.load %arg5[%c0_6, %c0_7] : memref<2x256xf32, #tpu.memory_space<vmem>>, vector<2x256xf32>
    %13 = arith.cmpf one, %12, %12 : vector<2x256xf32>
    %14 = arith.subf %11, %12 : vector<2x256xf32>
    %cst_8 = arith.constant 0.000000e+00 : f32
    %15 = vector.broadcast %cst_8 : f32 to vector<2x256xf32>
    %16 = arith.select %13, %15, %14 : vector<2x256xi1>, vector<2x256xf32>
    %17 = arith.mulf %16, %16 : vector<2x256xf32>
    %18 = vector.shape_cast %17 : vector<2x256xf32> to vector<1x2x256xf32>
    %cst_9 = arith.constant dense<0.000000e+00> : vector<1xf32>
    %19 = vector.multi_reduction <add>, %18, %cst_9 [1, 2] : vector<1x2x256xf32> to vector<1xf32>
    %20 = vector.shape_cast %19 : vector<1xf32> to vector<1x1x1xf32>
    %21 = vector.extract %20[0, 0, 0] : f32 from vector<1x1x1xf32>
    %c0_10 = arith.constant 0 : index
    %c0_11 = arith.constant 0 : index
    %22 = memref.load %arg6[%c0_10, %c0_11] : memref<1x1xf32, #tpu.memory_space<smem>>
    memref.store %21, %arg6[%c0_10, %c0_11] : memref<1x1xf32, #tpu.memory_space<smem>>
    %cst_12 = arith.constant 0.000000e+00 : f32
    %cst_13 = arith.constant 1.000000e+00 : f32
    %23 = vector.broadcast %cst_12 : f32 to vector<2x256xf32>
    %24 = vector.broadcast %cst_13 : f32 to vector<2x256xf32>
    %25 = arith.select %13, %23, %24 : vector<2x256xi1>, vector<2x256xf32>
    %26 = vector.shape_cast %25 : vector<2x256xf32> to vector<1x2x256xf32>
    %cst_14 = arith.constant dense<0.000000e+00> : vector<1xf32>
    %27 = vector.multi_reduction <add>, %26, %cst_14 [1, 2] : vector<1x2x256xf32> to vector<1xf32>
    %28 = vector.shape_cast %27 : vector<1xf32> to vector<1x1x1xf32>
    %29 = vector.extract %28[0, 0, 0] : f32 from vector<1x1x1xf32>
    %c0_15 = arith.constant 0 : index
    %c0_16 = arith.constant 0 : index
    %30 = memref.load %arg7[%c0_15, %c0_16] : memref<1x1xf32, #tpu.memory_space<smem>>
    memref.store %29, %arg7[%c0_15, %c0_16] : memref<1x1xf32, #tpu.memory_space<smem>>
    return
  }
  func.func @transform_0(%arg0: i32, %arg1: i32) -> (i32, i32) {
    %c0_i32 = arith.constant 0 : i32
    %c0_i32_0 = arith.constant 0 : i32
    return %arg0, %c0_i32 : i32, i32
  }
  func.func @transform_1(%arg0: i32, %arg1: i32) -> (i32, i32) {
    %c0_i32 = arith.constant 0 : i32
    %c0_i32_0 = arith.constant 0 : i32
    return %arg0, %c0_i32 : i32, i32
  }
  func.func @transform_2(%arg0: i32, %arg1: i32) -> (i32, i32) {
    %c0_i32 = arith.constant 0 : i32
    %c0_i32_0 = arith.constant 0 : i32
    %c0_i32_1 = arith.constant 0 : i32
    return %c0_i32, %c0_i32_0 : i32, i32
  }
  func.func @transform_3(%arg0: i32, %arg1: i32) -> (i32, i32) {
    %c0_i32 = arith.constant 0 : i32
    return %arg0, %arg1 : i32, i32
  }
  func.func @transform_4(%arg0: i32, %arg1: i32) -> (i32, i32) {
    %c0_i32 = arith.constant 0 : i32
    return %arg0, %arg1 : i32, i32
  }
  func.func @transform_5(%arg0: i32, %arg1: i32) -> (i32, i32) {
    %c0_i32 = arith.constant 0 : i32
    return %arg0, %arg1 : i32, i32
  }
}

</mosaic_0001>

<llo_original>
// kernel: tpu_custom_call.1
$region0: #{tpu_custom_call.1}
  #allocation0 [shape = 'u32[]', space=smem, size = 0x4, offset = 0x4, fixed_abs, tag = 'smem constant byte address 0x4 - core index']
  #allocation1 [shape = 'u32[144,128]{1,0:T(1,128)}', space=vmem, size = 0x12000, scoped, tag = 'internal scratch']
  %s0 = inlined_call_operand.vmem [shape: f32[2,8], index: 0, kind: input, shape index: {}]
  %s1 = inlined_call_operand.vmem [shape: s32[2,1], index: 1, kind: input, shape index: {}]
  %s2 = inlined_call_operand.hbm [shape: f32[13,32], index: 2, kind: input, shape index: {}]
  %s3 = inlined_call_operand.vmem [shape: f32[2,256], index: 3, kind: input, shape index: {}]
  %s4 = inlined_call_operand.hbm [shape: f32[1,1], index: 4, kind: output, shape index: {0}]
  %s5 = inlined_call_operand.hbm [shape: f32[1,1], index: 5, kind: output, shape index: {1}]
  %6 = xla_tuple %s4, %s5
  %s7 = sld [smem:[#allocation0]]
  $region38: #{tpu_custom_call.1} parent=0
    _
  %s9 = ssub.s32 1, %s7
  %s10 = scalar_select 0, %s9, %s7
  $region1: #{tpu_custom_call.1} parent=0
    #allocation2 [shape = 'u8[8192]{0}', space=vmem, size = 0x2000, scoped, tag = 'input window, operand 2, single buffered']
    #allocation3 [shape = 's32[1]{0}', space=sflag, size = 0x4, scoped, tag = 'scoped memory for tpu_custom_call.1']
    #allocation4 [shape = 's32[1]{0}', space=sflag, size = 0x4, scoped, tag = 'scoped memory for tpu_custom_call.1']
    #allocation5 [shape = 'u8[512]{0}', space=smem, size = 0x200, scoped, tag = 'output window, operand 0, single buffered']
    #allocation6 [shape = 'u8[512]{0}', space=smem, size = 0x200, scoped, tag = 'output window, operand 1, single buffered']
    #allocation7 [shape = 's32[1]{0}', space=sflag, size = 0x4, scoped, tag = 'scoped memory for tpu_custom_call.1']
    %11 = vsyncpa [#allocation3], 0
    %12 = vsyncpa [#allocation4], 0
    %13 = vsyncpa [#allocation7], 0
    // Predicated region
    $region2: #{tpu_custom_call.1} parent=1 // pred_check
      _
    $region3: #{tpu_custom_call.1} parent=1 // pred_check_branch
      %15 = sbr.rel (0) target = $region5
    $region4: #{tpu_custom_call.1} parent=1 // pred_region
      _
    $region5: #{tpu_custom_call.1} parent=1 // pred_fallthru
      _
    // Predicated region
    $region6: #{tpu_custom_call.1} parent=1 // pred_check
      _
    $region7: #{tpu_custom_call.1} parent=1 // pred_check_branch
      %17 = sbr.rel (0) target = $region9
    $region8: #{tpu_custom_call.1} parent=1 // pred_region
      _
    $region9: #{tpu_custom_call.1} parent=1 // pred_fallthru
      _
    // Predicated region
    $region10: #{tpu_custom_call.1} parent=1 // pred_check
      _
    $region11: #{tpu_custom_call.1} parent=1 // pred_check_branch
      %19 = sbr.rel (0) target = $region13
    $region12: #{tpu_custom_call.1} parent=1 // pred_region
      %s21 = ssub.s32 256, 256
      %22 = vsyncadd [#allocation3], %s21
      %s23 = sshll.u32 [#allocation2], 4
      %s24 = int_to_ptr.vmem [resolvable:$true] %s23
      %29 = dma.hbm_to_vmem [thread:$0]  %s2, 256, %s24, [#allocation3], 128, 128, 8
    $region13: #{tpu_custom_call.1} parent=1 // pred_fallthru
      _
    // Predicated region
    $region14: #{tpu_custom_call.1} parent=1 // pred_check
      _
    $region15: #{tpu_custom_call.1} parent=1 // pred_check_branch
      %31 = sbr.rel (0) target = $region17
    $region16: #{tpu_custom_call.1} parent=1 // pred_region
      _
    $region17: #{tpu_custom_call.1} parent=1 // pred_fallthru
      _
    // Predicated region
    $region18: #{tpu_custom_call.1} parent=1 // pred_check
      _
    $region19: #{tpu_custom_call.1} parent=1 // pred_check_branch
      %33 = sbr.rel (0) target = $region21
    $region20: #{tpu_custom_call.1} parent=1 // pred_region
      %34 = dma.done [#allocation3], 256
    $region21: #{tpu_custom_call.1} parent=1 // pred_fallthru
      _
    %v35 = vlaneseq
    %v36 = vand.u32 %v35, 127
    %v37 = vld [vmem:[%s1] sm:$0x3]
    %38 = vset.pattern.permute.xlu0 0
    %39 = vperm.xlu0 %38, %v37
    %v40 = vpop.permute.xlu0 %39
    %vm41 = vcmp.eq.s32.totalorder %v36, %v40
    %v42 = vsel %vm41, 1, 0
    %v43 = vcvt.s32.f32 %v42
    %v44 = vld [vmem:[%s0] sm:$0x3]
    %46 = vrot.lane.b32.xlu0 %v43, 8
    %v47 = vpop.permute.xlu0 %46
    %vm49 = vcmask 64512
    %v50 = vsel %vm49, %v44, %v47
    %vm51 = vcmask 97280
    %v52 = vsel %vm51, %v50, 1.0
    %v53 = vld [vmem:[#allocation2] sm:$0xff]
    %v54 = vld [vmem:[#allocation2 + $0x8] sm:$0x1f]
    %vm55 = vcmask 105472
    %v57 = vsel %vm55, %v52, 0
    %vm59 = vcmask 1044480
    %v61 = vsel %vm59, %v54, 0
    %63 = vmatprep.subr.mxu0 0.0
    %64 = vmatpush1.msra.mxu0 %v53
    %65 = vmatprep.subr.mxu0 0.0
    %66 = vmatpush1.msra.mxu0 %v61
    %67 = vmatprep.subr.mxu0 0.0
    %68 = vmatpush1.msra.mxu0 0.0
    %69 = vmatprep.subr.mxu0 0.0
    %70 = vmatpush1.msra.mxu0 0.0
    %71 = vmatprep.subr.mxu0 0.0
    %72 = vmatpush1.msra.mxu0 0.0
    %73 = vmatprep.subr.mxu0 0.0
    %74 = vmatpush1.msra.mxu0 0.0
    %75 = vmatprep.subr.mxu0 0.0
    %76 = vmatpush1.msra.mxu0 0.0
    %77 = vmatprep.subr.mxu0 0.0
    %78 = vmatpush1.msra.mxu0 0.0
    %79 = vmatprep.subr.mxu0 0.0
    %80 = vmatpush1.msra.mxu0 0.0
    %81 = vmatprep.subr.mxu0 0.0
    %82 = vmatpush1.msra.mxu0 0.0
    %83 = vmatprep.subr.mxu0 0.0
    %84 = vmatpush1.msra.mxu0 0.0
    %85 = vmatprep.subr.mxu0 0.0
    %86 = vmatpush1.msra.mxu0 0.0
    %87 = vmatprep.subr.mxu0 0.0
    %88 = vmatpush1.msra.mxu0 0.0
    %89 = vmatprep.subr.mxu0 0.0
    %90 = vmatpush1.msra.mxu0 0.0
    %91 = vmatprep.subr.mxu0 0.0
    %92 = vmatpush1.msra.mxu0 0.0
    %93 = vmatprep.subr.mxu0 0.0
    %94 = vmatpush1.msra.mxu0 0.0
    %95 = vmatprep.subr.mxu0 0.0
    %96 = vmatpush1.msra.mxu0 0.0
    %97 = vmatprep.subr.mxu0 0.0
    %98 = vmatpush1.msra.mxu0 0.0
    %99 = vmatprep.subr.mxu0 0.0
    %100 = vmatpush1.msra.mxu0 0.0
    %101 = vmatprep.subr.mxu0 0.0
    %102 = vmatpush1.msra.mxu0 0.0
    %103 = vmatprep.subr.mxu0 0.0
    %104 = vmatpush1.msra.mxu0 0.0
    %105 = vmatprep.subr.mxu0 0.0
    %106 = vmatpush1.msra.mxu0 0.0
    %107 = vmatprep.subr.mxu0 0.0
    %108 = vmatpush1.msra.mxu0 0.0
    %109 = vmatprep.subr.mxu0 0.0
    %110 = vmatpush1.msra.mxu0 0.0
    %111 = vmatprep.subr.mxu0 0.0
    %112 = vmatpush1.msra.mxu0 0.0
    %113 = vmatprep.subr.mxu0 0.0
    %114 = vmatpush1.msra.mxu0 0.0
    %115 = vmatprep.subr.mxu0 0.0
    %116 = vmatpush1.msra.mxu0 0.0
    %117 = vmatprep.subr.mxu0 0.0
    %118 = vmatpush1.msra.mxu0 0.0
    %119 = vmatprep.subr.mxu0 0.0
    %120 = vmatpush1.msra.mxu0 0.0
    %121 = vmatprep.subr.mxu0 0.0
    %122 = vmatpush1.msra.mxu0 0.0
    %123 = vmatprep.subr.mxu0 0.0
    %124 = vmatpush1.msra.mxu0 0.0
    %125 = vmatprep.subr.mxu0 0.0
    %126 = vmatpush1.msra.mxu0 0.0
    %127 = vmatprep.mubr.f32.mxu0 0.0
    %128 = vmatmul.mubr.f32.gmra.mrb[0].mxu0 %v57
    %v129 = vpop.f32.mrb[0].mxu0
    %v130 = vadd.f32 0.0, %v129
    %v131 = vpop.f32.mrb[0].mxu0
    %132 = vdwg.mxu0
    %134 = vrot.lane.b32.xlu0 %v130, 32
    %v135 = vpop.permute.xlu0 %134
    %137 = vrot.lane.b32.xlu0 %v130, 64
    %v138 = vpop.permute.xlu0 %137
    %140 = vrot.lane.b32.xlu0 %v130, 96
    %v141 = vpop.permute.xlu0 %140
    %vm143 = vcmask 261120
    %v144 = vsel %vm143, %v130, %v135
    %vm145 = vcmask 523264
    %v146 = vsel %vm145, %v144, %v138
    %vm147 = vcmask 785408
    %v148 = vsel %vm147, %v146, %v141
    %v149 = vld [vmem:[%s3] sm:$0xf]
    %vm150 = vcmp.ne.f32.partialorder %v149, %v149
    %v153 = vunpack.c.l.s4 1983009808
    %v154 = vunpack.c.0.s8 %v153
    %v155 = vlaneseq
    %v156 = vshrl.u32 %v155, 7
    %v157 = vsub.s32 %v154, %v156
    %v158 = vrot.slane %v149, %v157
    %v159 = vcombine.high %v158, %v158
    %v162 = vsub.f32 %v148, %v158
    %v163 = vsub.f32 %v148, %v159
    %v166 = vcombine.low %v162, %v163
    %v168 = vunpack.c.l.s4 1983009808
    %v169 = vunpack.c.0.s8 %v168
    %v170 = vlaneseq
    %v171 = vshrl.u32 %v170, 7
    %v172 = vsub.s32 %v169, %v171
    %v173 = vrot.slane %v166, %v172
    %v175 = vsel %vm150, 0.0, %v173
    %v176 = vmul.f32 %v175, %v175
    %v179 = vunpack.c.l.s4 1983009808
    %v180 = vunpack.c.0.s8 %v179
    %v181 = vlaneseq
    %v182 = vshrl.u32 %v181, 7
    %v183 = vsub.s32 %v180, %v182
    %v184 = vrot.slane %v176, %v183
    %v185 = vcombine.high %v184, %v184
    %vm188 = vcmask 1041408
    %v189 = vsel %vm188, %v184, 0.0
    %v190 = vsel %vm188, %v185, 0.0
    %v191 = vadd.f32 %v189, %v190
    %192 = vadd.xlane.f32.xlu0 %v191
    %v193 = vpop.xlane.xlu0 %192
    %v194 = vrot.slane %v193, 4
    %v195 = vadd.f32 %v193, %v194
    %v196 = vrot.slane %v195, 2
    %v197 = vadd.f32 %v195, %v196
    %v198 = vrot.slane %v197, 1
    %v199 = vadd.f32 %v197, %v198
    %s200 = vtos %v199
    %s201 = scalar_lea.smem [#allocation5], 0
    %202 = sst [smem:[%s201]] %s200
    %v203 = vsel %vm150, 0.0, 1.0
    %v206 = vunpack.c.l.s4 1983009808
    %v207 = vunpack.c.0.s8 %v206
    %v208 = vlaneseq
    %v209 = vshrl.u32 %v208, 7
    %v210 = vsub.s32 %v207, %v209
    %v211 = vrot.slane %v203, %v210
    %v212 = vcombine.high %v211, %v211
    %v215 = vsel %vm188, %v211, 0.0
    %v216 = vsel %vm188, %v212, 0.0
    %v217 = vadd.f32 %v215, %v216
    %218 = vadd.xlane.f32.xlu0 %v217
    %v219 = vpop.xlane.xlu0 %218
    %v220 = vrot.slane %v219, 4
    %v221 = vadd.f32 %v219, %v220
    %v222 = vrot.slane %v221, 2
    %v223 = vadd.f32 %v221, %v222
    %v224 = vrot.slane %v223, 1
    %v225 = vadd.f32 %v223, %v224
    %s226 = vtos %v225
    %s227 = scalar_lea.smem [#allocation6], 0
    %228 = sst [smem:[%s227]] %s226
    // Predicated region
    $region22: #{tpu_custom_call.1} parent=1 // pred_check
      _
    $region23: #{tpu_custom_call.1} parent=1 // pred_check_branch
      %230 = sbr.rel (0) target = $region25
    $region24: #{tpu_custom_call.1} parent=1 // pred_region
      %s232 = ssub.s32 16, 16
      %233 = vsyncadd [#allocation4], %s232
      %236 = dma.smem_to_hbm [#allocation5], 16, %s4, [#allocation4]
    $region25: #{tpu_custom_call.1} parent=1 // pred_fallthru
      _
    // Predicated region
    $region26: #{tpu_custom_call.1} parent=1 // pred_check
      _
    $region27: #{tpu_custom_call.1} parent=1 // pred_check_branch
      %238 = sbr.rel (0) target = $region29
    $region28: #{tpu_custom_call.1} parent=1 // pred_region
      %s240 = ssub.s32 16, 16
      %241 = vsyncadd [#allocation7], %s240
      %244 = dma.smem_to_hbm [#allocation6], 16, %s5, [#allocation7]
    $region29: #{tpu_custom_call.1} parent=1 // pred_fallthru
      _
    // Predicated region
    $region30: #{tpu_custom_call.1} parent=1 // pred_check
      _
    $region31: #{tpu_custom_call.1} parent=1 // pred_check_branch
      %246 = sbr.rel (0) target = $region33
    $region32: #{tpu_custom_call.1} parent=1 // pred_region
      %247 = dma.done [#allocation4], 16
    $region33: #{tpu_custom_call.1} parent=1 // pred_fallthru
      _
    // Predicated region
    $region34: #{tpu_custom_call.1} parent=1 // pred_check
      _
    $region35: #{tpu_custom_call.1} parent=1 // pred_check_branch
      %249 = sbr.rel (0) target = $region37
    $region36: #{tpu_custom_call.1} parent=1 // pred_region
      %250 = dma.done [#allocation7], 16
    $region37: #{tpu_custom_call.1} parent=1 // pred_fallthru
      _
    %251 = sfence
    %252 = vsyncpa [#allocation3], 1
    %253 = vsyncpa [#allocation4], 1
    %254 = vsyncpa [#allocation7], 1

</llo_original>
